<compile_context>
chip_gen: v5e
topology: v5e:2x2
jax: 0.10.0
libtpu: 0.0.40
codegen_flags: <defaults>
</compile_context>

<pallas_src>
import functools

import jax
import jax.numpy as jnp
from jax.experimental import pallas as pl
from jax.experimental.pallas import tpu as pltpu


def mha_kernel(q_ref, k_ref, v_ref, wq_ref, wk_ref, wv_ref, wfc_ref,
               gamma_ref, beta_ref, out_ref, attn_ref, ctx_ref, *,
               n_head, d_k, d_v, eps):
    bt, L, dm = q_ref.shape
    rows = bt * L
    bf16 = jnp.bfloat16
    f32 = jnp.float32

    xq = q_ref[...]                                  # (Bt, L, Dm) f32 (residual)
    x2q = xq.reshape(rows, dm)
    x2k = k_ref[...].reshape(rows, dm)
    x2v = v_ref[...].reshape(rows, dm)

    # Q/K/V projections: bf16 operands, f32 accumulation on the MXU.
    # 1/sqrt(d_k) is already folded into wq (parameter prep).
    q_proj = jnp.dot(x2q.astype(bf16), wq_ref[...], preferred_element_type=f32)
    k_proj = jnp.dot(x2k.astype(bf16), wk_ref[...], preferred_element_type=f32)
    v_proj = jnp.dot(x2v.astype(bf16), wv_ref[...], preferred_element_type=f32)

    qh = q_proj.reshape(bt, L, n_head * d_k).astype(bf16)
    kh = k_proj.reshape(bt, L, n_head * d_k).astype(bf16)
    vh = v_proj.reshape(bt, L, n_head * d_v).astype(bf16)

    # Per-head attention via static lane slices (no transposes / relayouts).
    for h in range(n_head):
        qs = qh[:, :, h * d_k:(h + 1) * d_k]          # (Bt, L, d_k) bf16
        ks = kh[:, :, h * d_k:(h + 1) * d_k]
        vs = vh[:, :, h * d_v:(h + 1) * d_v]

        s = jnp.einsum('bqd,bkd->bqk', qs, ks,
                       preferred_element_type=f32)    # (Bt, L, L) f32
        s = s - jnp.max(s, axis=-1, keepdims=True)
        e = jnp.exp(s)
        inv = pl.reciprocal(jnp.sum(e, axis=-1, keepdims=True), approx=True)
        p = e * inv                                    # softmax, f32

        attn_ref[:, h, :, :] = p.astype(attn_ref.dtype)

        ctx_h = jnp.einsum('bqk,bkd->bqd', p.astype(bf16), vs,
                           preferred_element_type=f32)  # (Bt, L, d_v)
        ctx_ref[:, :, h * d_v:(h + 1) * d_v] = ctx_h.astype(ctx_ref.dtype)

    # Output projection (bf16 ctx slab @ bf16 wfc) + residual + LayerNorm (f32).
    ctx = ctx_ref[...].reshape(rows, n_head * d_v)
    proj = jnp.dot(ctx, wfc_ref[...], preferred_element_type=f32)  # (rows, Dm)
    y = proj + x2q

    mean = jnp.mean(y, axis=-1, keepdims=True)
    var = jnp.mean(jnp.square(y - mean), axis=-1, keepdims=True)
    norm = (y - mean) * jax.lax.rsqrt(var + eps)
    out = norm * gamma_ref[...] + beta_ref[...]
    out_ref[...] = out.reshape(bt, L, dm).astype(out_ref.dtype)


def prepare_mha_params(wq, wk, wv, wfc, gamma, beta, *, d_k):
    """One-time parameter prep: fold temperature into wq, cast weights to bf16."""
    scale = 1.0 / (d_k ** 0.5)
    return ((wq * scale).astype(jnp.bfloat16),
            wk.astype(jnp.bfloat16),
            wv.astype(jnp.bfloat16),
            wfc.astype(jnp.bfloat16),
            gamma.astype(jnp.float32),
            beta.astype(jnp.float32))


def _pick_block_b(B, L, target_rows=256):
    bt = min(B, max(1, -(-target_rows // max(L, 1))))
    while B % bt:
        bt -= 1
    return bt


def multi_head_attention(q, k, v, params, *, n_head, d_k, d_v,
                         block_b=None, attn_dtype=jnp.float32):
    wq, wk, wv, wfc, gamma, beta = params
    B, L, Dm = q.shape
    if block_b is None:
        block_b = _pick_block_b(B, L)
    assert B % block_b == 0
    nb = B // block_b

    kernel = functools.partial(mha_kernel, n_head=n_head, d_k=d_k, d_v=d_v,
                               eps=1e-6)
    out, attn = pl.pallas_call(
        kernel,
        out_shape=(jax.ShapeDtypeStruct((B, L, Dm), q.dtype),
                   jax.ShapeDtypeStruct((B, n_head, L, L), attn_dtype)),
        grid_spec=pltpu.PrefetchScalarGridSpec(
            num_scalar_prefetch=0,
            grid=(nb,),
            in_specs=[
                pl.BlockSpec((block_b, L, Dm), lambda b: (b, 0, 0)),
                pl.BlockSpec((block_b, L, Dm), lambda b: (b, 0, 0)),
                pl.BlockSpec((block_b, L, Dm), lambda b: (b, 0, 0)),
                pl.BlockSpec((Dm, n_head * d_k), lambda b: (0, 0)),
                pl.BlockSpec((Dm, n_head * d_k), lambda b: (0, 0)),
                pl.BlockSpec((Dm, n_head * d_v), lambda b: (0, 0)),
                pl.BlockSpec((n_head * d_v, Dm), lambda b: (0, 0)),
                pl.BlockSpec((1, Dm), lambda b: (0, 0)),
                pl.BlockSpec((1, Dm), lambda b: (0, 0)),
            ],
            out_specs=(
                pl.BlockSpec((block_b, L, Dm), lambda b: (b, 0, 0)),
                pl.BlockSpec((block_b, n_head, L, L), lambda b: (b, 0, 0, 0)),
            ),
            scratch_shapes=[
                pltpu.VMEM((block_b, L, n_head * d_v), jnp.bfloat16),
            ],
        ),
        compiler_params=pltpu.CompilerParams(
            dimension_semantics=("parallel",)),
    )(q, k, v, wq, wk, wv, wfc, gamma, beta)
    return out, attn


def reference_mha(q, k, v, params, *, n_head, d_k, d_v, eps=1e-6):
    """Pure-JAX reference mirroring the kernel's bf16 cast points."""
    wq, wk, wv, wfc, gamma, beta = params
    B, L, Dm = q.shape
    bf16, f32 = jnp.bfloat16, jnp.float32
    Q = jnp.einsum('bld,df->blf', q.astype(bf16), wq, preferred_element_type=f32)
    K = jnp.einsum('bld,df->blf', k.astype(bf16), wk, preferred_element_type=f32)
    V = jnp.einsum('bld,df->blf', v.astype(bf16), wv, preferred_element_type=f32)
    Qh = Q.reshape(B, L, n_head, d_k).transpose(0, 2, 1, 3).astype(bf16)
    Kh = K.reshape(B, L, n_head, d_k).transpose(0, 2, 1, 3).astype(bf16)
    Vh = V.reshape(B, L, n_head, d_v).transpose(0, 2, 1, 3).astype(bf16)
    s = jnp.einsum('bhqd,bhkd->bhqk', Qh, Kh, preferred_element_type=f32)
    attn = jax.nn.softmax(s, axis=-1)
    ctx = jnp.einsum('bhqk,bhkd->bhqd', attn.astype(bf16), Vh,
                     preferred_element_type=f32)
    ctx = ctx.transpose(0, 2, 1, 3).reshape(B, L, n_head * d_v).astype(bf16)
    proj = jnp.einsum('blf,fd->bld', ctx, wfc, preferred_element_type=f32)
    y = proj + q
    mean = y.mean(-1, keepdims=True)
    var = ((y - mean) ** 2).mean(-1, keepdims=True)
    out = (y - mean) / jnp.sqrt(var + eps) * gamma[0] + beta[0]
    return out, attn


if __name__ == "__main__":
    # Small shapes consistent with the module's forward.
    B, L = 2, 8
    d_model, n_head, d_k, d_v = 32, 4, 8, 8

    key = jax.random.PRNGKey(0)
    kq, kk, kv, kwq, kwk, kwv, kwf = jax.random.split(key, 7)

    q = jax.random.normal(kq, (B, L, d_model), jnp.float32)
    k = jax.random.normal(kk, (B, L, d_model), jnp.float32)
    v = jax.random.normal(kv, (B, L, d_model), jnp.float32)

    # Deterministic parameter init (PyTorch Linear-style uniform(-1/sqrt(in), 1/sqrt(in))),
    # stored (in_features, out_features) so y = x @ W.
    def lin_init(key, fan_in, shape):
        bound = 1.0 / (fan_in ** 0.5)
        return jax.random.uniform(key, shape, jnp.float32, -bound, bound)

    wq = lin_init(kwq, d_model, (d_model, n_head * d_k))
    wk = lin_init(kwk, d_model, (d_model, n_head * d_k))
    wv = lin_init(kwv, d_model, (d_model, n_head * d_v))
    wfc = lin_init(kwf, n_head * d_v, (n_head * d_v, d_model))
    gamma = jnp.ones((1, d_model), jnp.float32)   # LayerNorm weight
    beta = jnp.zeros((1, d_model), jnp.float32)   # LayerNorm bias

    # One-time prep: fold 1/sqrt(d_k) into wq, cast weights to bf16.
    params = prepare_mha_params(wq, wk, wv, wfc, gamma, beta, d_k=d_k)

    out, attn = multi_head_attention(q, k, v, params,
                                     n_head=n_head, d_k=d_k, d_v=d_v)
    out = jax.block_until_ready(out)
    attn = jax.block_until_ready(attn)

    out_ref, attn_ref = reference_mha(q, k, v, params,
                                      n_head=n_head, d_k=d_k, d_v=d_v)
    assert out.shape == (B, L, d_model) and attn.shape == (B, n_head, L, L)
    # Tolerances account for the approximate (EUP) reciprocal in the softmax
    # normalization; everything else mirrors the reference's bf16/f32 path.
    assert jnp.allclose(attn, attn_ref, atol=2e-3), "attn mismatch vs reference"
    assert jnp.allclose(out, out_ref, atol=1e-2), "output mismatch vs reference"

    print("KERNEL_OK")
</pallas_src>

<mosaic_0001>
module attributes {stable_mosaic.version = 11 : i64} {
  func.func @mha_kernel(%arg0: i32, %arg1: memref<2x8x32xf32, #tpu.memory_space<vmem>>, %arg2: memref<2x8x32xf32, #tpu.memory_space<vmem>>, %arg3: memref<2x8x32xf32, #tpu.memory_space<vmem>>, %arg4: memref<32x32xbf16, #tpu.memory_space<vmem>>, %arg5: memref<32x32xbf16, #tpu.memory_space<vmem>>, %arg6: memref<32x32xbf16, #tpu.memory_space<vmem>>, %arg7: memref<32x32xbf16, #tpu.memory_space<vmem>>, %arg8: memref<1x32xf32, #tpu.memory_space<vmem>>, %arg9: memref<1x32xf32, #tpu.memory_space<vmem>>, %arg10: memref<2x8x32xf32, #tpu.memory_space<vmem>>, %arg11: memref<2x4x8x8xf32, #tpu.memory_space<vmem>>, %arg12: memref<2x8x32xbf16, #tpu.memory_space<vmem>>) attributes {dimension_semantics = [#tpu.dimension_semantics<parallel>], iteration_bounds = array<i64: 1>, scalar_prefetch = 0 : i64, scratch_operands = 1 : i64, tpu.core_type = #tpu.core_type<tc>, window_params = [{transform_indices = @transform_0, window_bounds = array<i64: 2, 8, 32>}, {transform_indices = @transform_1, window_bounds = array<i64: 2, 8, 32>}, {transform_indices = @transform_2, window_bounds = array<i64: 2, 8, 32>}, {pipeline_mode = #tpu.pipeline_mode<synchronous>, transform_indices = @transform_3, window_bounds = array<i64: 32, 32>}, {pipeline_mode = #tpu.pipeline_mode<synchronous>, transform_indices = @transform_4, window_bounds = array<i64: 32, 32>}, {pipeline_mode = #tpu.pipeline_mode<synchronous>, transform_indices = @transform_5, window_bounds = array<i64: 32, 32>}, {pipeline_mode = #tpu.pipeline_mode<synchronous>, transform_indices = @transform_6, window_bounds = array<i64: 32, 32>}, {pipeline_mode = #tpu.pipeline_mode<synchronous>, transform_indices = @transform_7, window_bounds = array<i64: 1, 32>}, {pipeline_mode = #tpu.pipeline_mode<synchronous>, transform_indices = @transform_8, window_bounds = array<i64: 1, 32>}, {transform_indices = @transform_9, window_bounds = array<i64: 2, 8, 32>}, {transform_indices = @transform_10, window_bounds = array<i64: 2, 4, 8, 8>}]} {
    %c0 = arith.constant 0 : index
    %c0_0 = arith.constant 0 : index
    %c0_1 = arith.constant 0 : index
    %0 = vector.load %arg1[%c0, %c0_0, %c0_1] : memref<2x8x32xf32, #tpu.memory_space<vmem>>, vector<2x8x32xf32>
    %1 = vector.shape_cast %0 : vector<2x8x32xf32> to vector<16x32xf32>
    %c0_2 = arith.constant 0 : index
    %c0_3 = arith.constant 0 : index
    %c0_4 = arith.constant 0 : index
    %2 = vector.load %arg2[%c0_2, %c0_3, %c0_4] : memref<2x8x32xf32, #tpu.memory_space<vmem>>, vector<2x8x32xf32>
    %3 = vector.shape_cast %2 : vector<2x8x32xf32> to vector<16x32xf32>
    %c0_5 = arith.constant 0 : index
    %c0_6 = arith.constant 0 : index
    %c0_7 = arith.constant 0 : index
    %4 = vector.load %arg3[%c0_5, %c0_6, %c0_7] : memref<2x8x32xf32, #tpu.memory_space<vmem>>, vector<2x8x32xf32>
    %5 = vector.shape_cast %4 : vector<2x8x32xf32> to vector<16x32xf32>
    %6 = arith.truncf %1 : vector<16x32xf32> to vector<16x32xbf16>
    %c0_8 = arith.constant 0 : index
    %c0_9 = arith.constant 0 : index
    %7 = vector.load %arg4[%c0_8, %c0_9] : memref<32x32xbf16, #tpu.memory_space<vmem>>, vector<32x32xbf16>
    %cst = arith.constant dense<0.000000e+00> : vector<16x32xf32>
    %8 = tpu.matmul %6, %7, %cst {dimension_numbers = #tpu.dot_dimension_numbers<[1], [0], [0], [1], [0, 0, 1, 1], [], []>} : vector<16x32xbf16>, vector<32x32xbf16>, vector<16x32xf32> -> vector<16x32xf32>
    %9 = arith.truncf %3 : vector<16x32xf32> to vector<16x32xbf16>
    %c0_10 = arith.constant 0 : index
    %c0_11 = arith.constant 0 : index
    %10 = vector.load %arg5[%c0_10, %c0_11] : memref<32x32xbf16, #tpu.memory_space<vmem>>, vector<32x32xbf16>
    %cst_12 = arith.constant dense<0.000000e+00> : vector<16x32xf32>
    %11 = tpu.matmul %9, %10, %cst_12 {dimension_numbers = #tpu.dot_dimension_numbers<[1], [0], [0], [1], [0, 0, 1, 1], [], []>} : vector<16x32xbf16>, vector<32x32xbf16>, vector<16x32xf32> -> vector<16x32xf32>
    %12 = arith.truncf %5 : vector<16x32xf32> to vector<16x32xbf16>
    %c0_13 = arith.constant 0 : index
    %c0_14 = arith.constant 0 : index
    %13 = vector.load %arg6[%c0_13, %c0_14] : memref<32x32xbf16, #tpu.memory_space<vmem>>, vector<32x32xbf16>
    %cst_15 = arith.constant dense<0.000000e+00> : vector<16x32xf32>
    %14 = tpu.matmul %12, %13, %cst_15 {dimension_numbers = #tpu.dot_dimension_numbers<[1], [0], [0], [1], [0, 0, 1, 1], [], []>} : vector<16x32xbf16>, vector<32x32xbf16>, vector<16x32xf32> -> vector<16x32xf32>
    %15 = vector.shape_cast %8 : vector<16x32xf32> to vector<2x8x32xf32>
    %16 = arith.truncf %15 : vector<2x8x32xf32> to vector<2x8x32xbf16>
    %17 = vector.shape_cast %11 : vector<16x32xf32> to vector<2x8x32xf32>
    %18 = arith.truncf %17 : vector<2x8x32xf32> to vector<2x8x32xbf16>
    %19 = vector.shape_cast %14 : vector<16x32xf32> to vector<2x8x32xf32>
    %20 = arith.truncf %19 : vector<2x8x32xf32> to vector<2x8x32xbf16>
    %21 = vector.extract_strided_slice %16 {offsets = [0, 0, 0], sizes = [2, 8, 8], strides = [1, 1, 1]} : vector<2x8x32xbf16> to vector<2x8x8xbf16>
    %22 = vector.extract_strided_slice %18 {offsets = [0, 0, 0], sizes = [2, 8, 8], strides = [1, 1, 1]} : vector<2x8x32xbf16> to vector<2x8x8xbf16>
    %23 = vector.extract_strided_slice %20 {offsets = [0, 0, 0], sizes = [2, 8, 8], strides = [1, 1, 1]} : vector<2x8x32xbf16> to vector<2x8x8xbf16>
    "tpu.trace_start"() <{level = 10 : i32, message = "bqd,bkd->bqk"}> : () -> ()
    %cst_16 = arith.constant dense<0.000000e+00> : vector<2x8x8xf32>
    %24 = tpu.matmul %21, %22, %cst_16 {dimension_numbers = #tpu.dot_dimension_numbers<[2], [2], [1], [1], [0, 0, 0, 1, 1, 1], [0], [0]>} : vector<2x8x8xbf16>, vector<2x8x8xbf16>, vector<2x8x8xf32> -> vector<2x8x8xf32>
    "tpu.trace_stop"() : () -> ()
    %cst_17 = arith.constant dense<0xFF800000> : vector<2x8xf32>
    %25 = vector.multi_reduction <maximumf>, %24, %cst_17 [2] : vector<2x8x8xf32> to vector<2x8xf32>
    %26 = vector.shape_cast %25 : vector<2x8xf32> to vector<2x8x1xf32>
    %27 = vector.broadcast %26 : vector<2x8x1xf32> to vector<2x8x8xf32>
    %28 = arith.subf %24, %27 : vector<2x8x8xf32>
    %29 = math.exp %28 : vector<2x8x8xf32>
    %cst_18 = arith.constant dense<0.000000e+00> : vector<2x8xf32>
    %30 = vector.multi_reduction <add>, %29, %cst_18 [2] : vector<2x8x8xf32> to vector<2x8xf32>
    %31 = vector.shape_cast %30 : vector<2x8xf32> to vector<2x8x1xf32>
    %32 = tpu.reciprocal %31 {approx = true} : vector<2x8x1xf32> -> vector<2x8x1xf32>
    %33 = vector.broadcast %32 : vector<2x8x1xf32> to vector<2x8x8xf32>
    %34 = arith.mulf %29, %33 : vector<2x8x8xf32>
    %c0_19 = arith.constant 0 : index
    %c0_20 = arith.constant 0 : index
    %c0_21 = arith.constant 0 : index
    %c0_22 = arith.constant 0 : index
    %35 = vector.load %arg11[%c0_19, %c0_20, %c0_21, %c0_22] : memref<2x4x8x8xf32, #tpu.memory_space<vmem>>, vector<2x1x8x8xf32>
    %36 = vector.shape_cast %35 : vector<2x1x8x8xf32> to vector<2x8x8xf32>
    %37 = vector.shape_cast %34 : vector<2x8x8xf32> to vector<2x1x8x8xf32>
    tpu.vector_store %arg11[%c0_19, %c0_20, %c0_21, %c0_22], %37 {strides = array<i32>} : memref<2x4x8x8xf32, #tpu.memory_space<vmem>>, vector<2x1x8x8xf32>,
    %38 = arith.truncf %34 : vector<2x8x8xf32> to vector<2x8x8xbf16>
    "tpu.trace_start"() <{level = 10 : i32, message = "bqk,bkd->bqd"}> : () -> ()
    %cst_23 = arith.constant dense<0.000000e+00> : vector<2x8x8xf32>
    %39 = tpu.matmul %38, %23, %cst_23 {dimension_numbers = #tpu.dot_dimension_numbers<[2], [1], [1], [2], [0, 0, 0, 1, 1, 2], [0], [0]>} : vector<2x8x8xbf16>, vector<2x8x8xbf16>, vector<2x8x8xf32> -> vector<2x8x8xf32>
    "tpu.trace_stop"() : () -> ()
    %40 = arith.truncf %39 : vector<2x8x8xf32> to vector<2x8x8xbf16>
    %c0_24 = arith.constant 0 : index
    %c0_25 = arith.constant 0 : index
    %c0_26 = arith.constant 0 : index
    %41 = vector.load %arg12[%c0_24, %c0_25, %c0_26] : memref<2x8x32xbf16, #tpu.memory_space<vmem>>, vector<2x8x8xbf16>
    tpu.vector_store %arg12[%c0_24, %c0_25, %c0_26], %40 {strides = array<i32>} : memref<2x8x32xbf16, #tpu.memory_space<vmem>>, vector<2x8x8xbf16>,
    %42 = vector.extract_strided_slice %16 {offsets = [0, 0, 8], sizes = [2, 8, 8], strides = [1, 1, 1]} : vector<2x8x32xbf16> to vector<2x8x8xbf16>
    %43 = vector.extract_strided_slice %18 {offsets = [0, 0, 8], sizes = [2, 8, 8], strides = [1, 1, 1]} : vector<2x8x32xbf16> to vector<2x8x8xbf16>
    %44 = vector.extract_strided_slice %20 {offsets = [0, 0, 8], sizes = [2, 8, 8], strides = [1, 1, 1]} : vector<2x8x32xbf16> to vector<2x8x8xbf16>
    "tpu.trace_start"() <{level = 10 : i32, message = "bqd,bkd->bqk"}> : () -> ()
    %cst_27 = arith.constant dense<0.000000e+00> : vector<2x8x8xf32>
    %45 = tpu.matmul %42, %43, %cst_27 {dimension_numbers = #tpu.dot_dimension_numbers<[2], [2], [1], [1], [0, 0, 0, 1, 1, 1], [0], [0]>} : vector<2x8x8xbf16>, vector<2x8x8xbf16>, vector<2x8x8xf32> -> vector<2x8x8xf32>
    "tpu.trace_stop"() : () -> ()
    %cst_28 = arith.constant dense<0xFF800000> : vector<2x8xf32>
    %46 = vector.multi_reduction <maximumf>, %45, %cst_28 [2] : vector<2x8x8xf32> to vector<2x8xf32>
    %47 = vector.shape_cast %46 : vector<2x8xf32> to vector<2x8x1xf32>
    %48 = vector.broadcast %47 : vector<2x8x1xf32> to vector<2x8x8xf32>
    %49 = arith.subf %45, %48 : vector<2x8x8xf32>
    %50 = math.exp %49 : vector<2x8x8xf32>
    %cst_29 = arith.constant dense<0.000000e+00> : vector<2x8xf32>
    %51 = vector.multi_reduction <add>, %50, %cst_29 [2] : vector<2x8x8xf32> to vector<2x8xf32>
    %52 = vector.shape_cast %51 : vector<2x8xf32> to vector<2x8x1xf32>
    %53 = tpu.reciprocal %52 {approx = true} : vector<2x8x1xf32> -> vector<2x8x1xf32>
    %54 = vector.broadcast %53 : vector<2x8x1xf32> to vector<2x8x8xf32>
    %55 = arith.mulf %50, %54 : vector<2x8x8xf32>
    %c0_30 = arith.constant 0 : index
    %c1 = arith.constant 1 : index
    %c0_31 = arith.constant 0 : index
    %c0_32 = arith.constant 0 : index
    %56 = vector.load %arg11[%c0_30, %c1, %c0_31, %c0_32] : memref<2x4x8x8xf32, #tpu.memory_space<vmem>>, vector<2x1x8x8xf32>
    %57 = vector.shape_cast %56 : vector<2x1x8x8xf32> to vector<2x8x8xf32>
    %58 = vector.shape_cast %55 : vector<2x8x8xf32> to vector<2x1x8x8xf32>
    tpu.vector_store %arg11[%c0_30, %c1, %c0_31, %c0_32], %58 {strides = array<i32>} : memref<2x4x8x8xf32, #tpu.memory_space<vmem>>, vector<2x1x8x8xf32>,
    %59 = arith.truncf %55 : vector<2x8x8xf32> to vector<2x8x8xbf16>
    "tpu.trace_start"() <{level = 10 : i32, message = "bqk,bkd->bqd"}> : () -> ()
    %cst_33 = arith.constant dense<0.000000e+00> : vector<2x8x8xf32>
    %60 = tpu.matmul %59, %44, %cst_33 {dimension_numbers = #tpu.dot_dimension_numbers<[2], [1], [1], [2], [0, 0, 0, 1, 1, 2], [0], [0]>} : vector<2x8x8xbf16>, vector<2x8x8xbf16>, vector<2x8x8xf32> -> vector<2x8x8xf32>
    "tpu.trace_stop"() : () -> ()
    %61 = arith.truncf %60 : vector<2x8x8xf32> to vector<2x8x8xbf16>
    %c0_34 = arith.constant 0 : index
    %c0_35 = arith.constant 0 : index
    %c8 = arith.constant 8 : index
    %62 = vector.load %arg12[%c0_34, %c0_35, %c8] : memref<2x8x32xbf16, #tpu.memory_space<vmem>>, vector<2x8x8xbf16>
    tpu.vector_store %arg12[%c0_34, %c0_35, %c8], %61 {strides = array<i32>} : memref<2x8x32xbf16, #tpu.memory_space<vmem>>, vector<2x8x8xbf16>,
    %63 = vector.extract_strided_slice %16 {offsets = [0, 0, 16], sizes = [2, 8, 8], strides = [1, 1, 1]} : vector<2x8x32xbf16> to vector<2x8x8xbf16>
    %64 = vector.extract_strided_slice %18 {offsets = [0, 0, 16], sizes = [2, 8, 8], strides = [1, 1, 1]} : vector<2x8x32xbf16> to vector<2x8x8xbf16>
    %65 = vector.extract_strided_slice %20 {offsets = [0, 0, 16], sizes = [2, 8, 8], strides = [1, 1, 1]} : vector<2x8x32xbf16> to vector<2x8x8xbf16>
    "tpu.trace_start"() <{level = 10 : i32, message = "bqd,bkd->bqk"}> : () -> ()
    %cst_36 = arith.constant dense<0.000000e+00> : vector<2x8x8xf32>
    %66 = tpu.matmul %63, %64, %cst_36 {dimension_numbers = #tpu.dot_dimension_numbers<[2], [2], [1], [1], [0, 0, 0, 1, 1, 1], [0], [0]>} : vector<2x8x8xbf16>, vector<2x8x8xbf16>, vector<2x8x8xf32> -> vector<2x8x8xf32>
    "tpu.trace_stop"() : () -> ()
    %cst_37 = arith.constant dense<0xFF800000> : vector<2x8xf32>
    %67 = vector.multi_reduction <maximumf>, %66, %cst_37 [2] : vector<2x8x8xf32> to vector<2x8xf32>
    %68 = vector.shape_cast %67 : vector<2x8xf32> to vector<2x8x1xf32>
    %69 = vector.broadcast %68 : vector<2x8x1xf32> to vector<2x8x8xf32>
    %70 = arith.subf %66, %69 : vector<2x8x8xf32>
    %71 = math.exp %70 : vector<2x8x8xf32>
    %cst_38 = arith.constant dense<0.000000e+00> : vector<2x8xf32>
    %72 = vector.multi_reduction <add>, %71, %cst_38 [2] : vector<2x8x8xf32> to vector<2x8xf32>
    %73 = vector.shape_cast %72 : vector<2x8xf32> to vector<2x8x1xf32>
    %74 = tpu.reciprocal %73 {approx = true} : vector<2x8x1xf32> -> vector<2x8x1xf32>
    %75 = vector.broadcast %74 : vector<2x8x1xf32> to vector<2x8x8xf32>
    %76 = arith.mulf %71, %75 : vector<2x8x8xf32>
    %c0_39 = arith.constant 0 : index
    %c2 = arith.constant 2 : index
    %c0_40 = arith.constant 0 : index
    %c0_41 = arith.constant 0 : index
    %77 = vector.load %arg11[%c0_39, %c2, %c0_40, %c0_41] : memref<2x4x8x8xf32, #tpu.memory_space<vmem>>, vector<2x1x8x8xf32>
    %78 = vector.shape_cast %77 : vector<2x1x8x8xf32> to vector<2x8x8xf32>
    %79 = vector.shape_cast %76 : vector<2x8x8xf32> to vector<2x1x8x8xf32>
    tpu.vector_store %arg11[%c0_39, %c2, %c0_40, %c0_41], %79 {strides = array<i32>} : memref<2x4x8x8xf32, #tpu.memory_space<vmem>>, vector<2x1x8x8xf32>,
    %80 = arith.truncf %76 : vector<2x8x8xf32> to vector<2x8x8xbf16>
    "tpu.trace_start"() <{level = 10 : i32, message = "bqk,bkd->bqd"}> : () -> ()
    %cst_42 = arith.constant dense<0.000000e+00> : vector<2x8x8xf32>
    %81 = tpu.matmul %80, %65, %cst_42 {dimension_numbers = #tpu.dot_dimension_numbers<[2], [1], [1], [2], [0, 0, 0, 1, 1, 2], [0], [0]>} : vector<2x8x8xbf16>, vector<2x8x8xbf16>, vector<2x8x8xf32> -> vector<2x8x8xf32>
    "tpu.trace_stop"() : () -> ()
    %82 = arith.truncf %81 : vector<2x8x8xf32> to vector<2x8x8xbf16>
    %c0_43 = arith.constant 0 : index
    %c0_44 = arith.constant 0 : index
    %c16 = arith.constant 16 : index
    %83 = vector.load %arg12[%c0_43, %c0_44, %c16] : memref<2x8x32xbf16, #tpu.memory_space<vmem>>, vector<2x8x8xbf16>
    tpu.vector_store %arg12[%c0_43, %c0_44, %c16], %82 {strides = array<i32>} : memref<2x8x32xbf16, #tpu.memory_space<vmem>>, vector<2x8x8xbf16>,
    %84 = vector.extract_strided_slice %16 {offsets = [0, 0, 24], sizes = [2, 8, 8], strides = [1, 1, 1]} : vector<2x8x32xbf16> to vector<2x8x8xbf16>
    %85 = vector.extract_strided_slice %18 {offsets = [0, 0, 24], sizes = [2, 8, 8], strides = [1, 1, 1]} : vector<2x8x32xbf16> to vector<2x8x8xbf16>
    %86 = vector.extract_strided_slice %20 {offsets = [0, 0, 24], sizes = [2, 8, 8], strides = [1, 1, 1]} : vector<2x8x32xbf16> to vector<2x8x8xbf16>
    "tpu.trace_start"() <{level = 10 : i32, message = "bqd,bkd->bqk"}> : () -> ()
    %cst_45 = arith.constant dense<0.000000e+00> : vector<2x8x8xf32>
    %87 = tpu.matmul %84, %85, %cst_45 {dimension_numbers = #tpu.dot_dimension_numbers<[2], [2], [1], [1], [0, 0, 0, 1, 1, 1], [0], [0]>} : vector<2x8x8xbf16>, vector<2x8x8xbf16>, vector<2x8x8xf32> -> vector<2x8x8xf32>
    "tpu.trace_stop"() : () -> ()
    %cst_46 = arith.constant dense<0xFF800000> : vector<2x8xf32>
    %88 = vector.multi_reduction <maximumf>, %87, %cst_46 [2] : vector<2x8x8xf32> to vector<2x8xf32>
    %89 = vector.shape_cast %88 : vector<2x8xf32> to vector<2x8x1xf32>
    %90 = vector.broadcast %89 : vector<2x8x1xf32> to vector<2x8x8xf32>
    %91 = arith.subf %87, %90 : vector<2x8x8xf32>
    %92 = math.exp %91 : vector<2x8x8xf32>
    %cst_47 = arith.constant dense<0.000000e+00> : vector<2x8xf32>
    %93 = vector.multi_reduction <add>, %92, %cst_47 [2] : vector<2x8x8xf32> to vector<2x8xf32>
    %94 = vector.shape_cast %93 : vector<2x8xf32> to vector<2x8x1xf32>
    %95 = tpu.reciprocal %94 {approx = true} : vector<2x8x1xf32> -> vector<2x8x1xf32>
    %96 = vector.broadcast %95 : vector<2x8x1xf32> to vector<2x8x8xf32>
    %97 = arith.mulf %92, %96 : vector<2x8x8xf32>
    %c0_48 = arith.constant 0 : index
    %c3 = arith.constant 3 : index
    %c0_49 = arith.constant 0 : index
    %c0_50 = arith.constant 0 : index
    %98 = vector.load %arg11[%c0_48, %c3, %c0_49, %c0_50] : memref<2x4x8x8xf32, #tpu.memory_space<vmem>>, vector<2x1x8x8xf32>
    %99 = vector.shape_cast %98 : vector<2x1x8x8xf32> to vector<2x8x8xf32>
    %100 = vector.shape_cast %97 : vector<2x8x8xf32> to vector<2x1x8x8xf32>
    tpu.vector_store %arg11[%c0_48, %c3, %c0_49, %c0_50], %100 {strides = array<i32>} : memref<2x4x8x8xf32, #tpu.memory_space<vmem>>, vector<2x1x8x8xf32>,
    %101 = arith.truncf %97 : vector<2x8x8xf32> to vector<2x8x8xbf16>
    "tpu.trace_start"() <{level = 10 : i32, message = "bqk,bkd->bqd"}> : () -> ()
    %cst_51 = arith.constant dense<0.000000e+00> : vector<2x8x8xf32>
    %102 = tpu.matmul %101, %86, %cst_51 {dimension_numbers = #tpu.dot_dimension_numbers<[2], [1], [1], [2], [0, 0, 0, 1, 1, 2], [0], [0]>} : vector<2x8x8xbf16>, vector<2x8x8xbf16>, vector<2x8x8xf32> -> vector<2x8x8xf32>
    "tpu.trace_stop"() : () -> ()
    %103 = arith.truncf %102 : vector<2x8x8xf32> to vector<2x8x8xbf16>
    %c0_52 = arith.constant 0 : index
    %c0_53 = arith.constant 0 : index
    %c24 = arith.constant 24 : index
    %104 = vector.load %arg12[%c0_52, %c0_53, %c24] : memref<2x8x32xbf16, #tpu.memory_space<vmem>>, vector<2x8x8xbf16>
    tpu.vector_store %arg12[%c0_52, %c0_53, %c24], %103 {strides = array<i32>} : memref<2x8x32xbf16, #tpu.memory_space<vmem>>, vector<2x8x8xbf16>,
    %c0_54 = arith.constant 0 : index
    %c0_55 = arith.constant 0 : index
    %c0_56 = arith.constant 0 : index
    %105 = vector.load %arg12[%c0_54, %c0_55, %c0_56] : memref<2x8x32xbf16, #tpu.memory_space<vmem>>, vector<2x8x32xbf16>
    %106 = vector.shape_cast %105 : vector<2x8x32xbf16> to vector<16x32xbf16>
    %c0_57 = arith.constant 0 : index
    %c0_58 = arith.constant 0 : index
    %107 = vector.load %arg7[%c0_57, %c0_58] : memref<32x32xbf16, #tpu.memory_space<vmem>>, vector<32x32xbf16>
    %cst_59 = arith.constant dense<0.000000e+00> : vector<16x32xf32>
    %108 = tpu.matmul %106, %107, %cst_59 {dimension_numbers = #tpu.dot_dimension_numbers<[1], [0], [0], [1], [0, 0, 1, 1], [], []>} : vector<16x32xbf16>, vector<32x32xbf16>, vector<16x32xf32> -> vector<16x32xf32>
    %109 = arith.addf %108, %1 : vector<16x32xf32>
    %cst_60 = arith.constant dense<0.000000e+00> : vector<16xf32>
    %110 = vector.multi_reduction <add>, %109, %cst_60 [1] : vector<16x32xf32> to vector<16xf32>
    %111 = vector.shape_cast %110 : vector<16xf32> to vector<16x1xf32>
    %cst_61 = arith.constant 3.200000e+01 : f32
    %112 = vector.broadcast %cst_61 : f32 to vector<16x1xf32>
    %113 = arith.divf %111, %112 : vector<16x1xf32>
    %114 = vector.broadcast %113 : vector<16x1xf32> to vector<16x32xf32>
    %115 = arith.subf %109, %114 : vector<16x32xf32>
    %116 = arith.mulf %115, %115 : vector<16x32xf32>
    %cst_62 = arith.constant dense<0.000000e+00> : vector<16xf32>
    %117 = vector.multi_reduction <add>, %116, %cst_62 [1] : vector<16x32xf32> to vector<16xf32>
    %118 = vector.shape_cast %117 : vector<16xf32> to vector<16x1xf32>
    %cst_63 = arith.constant 3.200000e+01 : f32
    %119 = vector.broadcast %cst_63 : f32 to vector<16x1xf32>
    %120 = arith.divf %118, %119 : vector<16x1xf32>
    %121 = vector.broadcast %113 : vector<16x1xf32> to vector<16x32xf32>
    %122 = arith.subf %109, %121 : vector<16x32xf32>
    %cst_64 = arith.constant 9.99999997E-7 : f32
    %123 = vector.broadcast %cst_64 : f32 to vector<16x1xf32>
    %124 = arith.addf %120, %123 : vector<16x1xf32>
    %125 = math.rsqrt %124 : vector<16x1xf32>
    %126 = vector.broadcast %125 : vector<16x1xf32> to vector<16x32xf32>
    %127 = arith.mulf %122, %126 : vector<16x32xf32>
    %c0_65 = arith.constant 0 : index
    %c0_66 = arith.constant 0 : index
    %128 = vector.load %arg8[%c0_65, %c0_66] : memref<1x32xf32, #tpu.memory_space<vmem>>, vector<1x32xf32>
    %129 = vector.broadcast %128 : vector<1x32xf32> to vector<16x32xf32>
    %130 = arith.mulf %127, %129 : vector<16x32xf32>
    %c0_67 = arith.constant 0 : index
    %c0_68 = arith.constant 0 : index
    %131 = vector.load %arg9[%c0_67, %c0_68] : memref<1x32xf32, #tpu.memory_space<vmem>>, vector<1x32xf32>
    %132 = vector.broadcast %131 : vector<1x32xf32> to vector<16x32xf32>
    %133 = arith.addf %130, %132 : vector<16x32xf32>
    %134 = vector.shape_cast %133 : vector<16x32xf32> to vector<2x8x32xf32>
    %c0_69 = arith.constant 0 : index
    %c0_70 = arith.constant 0 : index
    %c0_71 = arith.constant 0 : index
    %135 = vector.load %arg10[%c0_69, %c0_70, %c0_71] : memref<2x8x32xf32, #tpu.memory_space<vmem>>, vector<2x8x32xf32>
    tpu.vector_store %arg10[%c0_69, %c0_70, %c0_71], %134 {strides = array<i32>} : memref<2x8x32xf32, #tpu.memory_space<vmem>>, vector<2x8x32xf32>,
    return
  }
  func.func @transform_0(%arg0: i32) -> (i32, i32, i32) {
    %c0_i32 = arith.constant 0 : i32
    %c0_i32_0 = arith.constant 0 : i32
    %c0_i32_1 = arith.constant 0 : i32
    return %arg0, %c0_i32, %c0_i32_0 : i32, i32, i32
  }
  func.func @transform_1(%arg0: i32) -> (i32, i32, i32) {
    %c0_i32 = arith.constant 0 : i32
    %c0_i32_0 = arith.constant 0 : i32
    %c0_i32_1 = arith.constant 0 : i32
    return %arg0, %c0_i32, %c0_i32_0 : i32, i32, i32
  }
  func.func @transform_2(%arg0: i32) -> (i32, i32, i32) {
    %c0_i32 = arith.constant 0 : i32
    %c0_i32_0 = arith.constant 0 : i32
    %c0_i32_1 = arith.constant 0 : i32
    return %arg0, %c0_i32, %c0_i32_0 : i32, i32, i32
  }
  func.func @transform_3(%arg0: i32) -> (i32, i32) {
    %c0_i32 = arith.constant 0 : i32
    %c0_i32_0 = arith.constant 0 : i32
    %c0_i32_1 = arith.constant 0 : i32
    return %c0_i32, %c0_i32_0 : i32, i32
  }
  func.func @transform_4(%arg0: i32) -> (i32, i32) {
    %c0_i32 = arith.constant 0 : i32
    %c0_i32_0 = arith.constant 0 : i32
    %c0_i32_1 = arith.constant 0 : i32
    return %c0_i32, %c0_i32_0 : i32, i32
  }
  func.func @transform_5(%arg0: i32) -> (i32, i32) {
    %c0_i32 = arith.constant 0 : i32
    %c0_i32_0 = arith.constant 0 : i32
    %c0_i32_1 = arith.constant 0 : i32
    return %c0_i32, %c0_i32_0 : i32, i32
  }
  func.func @transform_6(%arg0: i32) -> (i32, i32) {
    %c0_i32 = arith.constant 0 : i32
    %c0_i32_0 = arith.constant 0 : i32
    %c0_i32_1 = arith.constant 0 : i32
    return %c0_i32, %c0_i32_0 : i32, i32
  }
  func.func @transform_7(%arg0: i32) -> (i32, i32) {
    %c0_i32 = arith.constant 0 : i32
    %c0_i32_0 = arith.constant 0 : i32
    %c0_i32_1 = arith.constant 0 : i32
    return %c0_i32, %c0_i32_0 : i32, i32
  }
  func.func @transform_8(%arg0: i32) -> (i32, i32) {
    %c0_i32 = arith.constant 0 : i32
    %c0_i32_0 = arith.constant 0 : i32
    %c0_i32_1 = arith.constant 0 : i32
    return %c0_i32, %c0_i32_0 : i32, i32
  }
  func.func @transform_9(%arg0: i32) -> (i32, i32, i32) {
    %c0_i32 = arith.constant 0 : i32
    %c0_i32_0 = arith.constant 0 : i32
    %c0_i32_1 = arith.constant 0 : i32
    return %arg0, %c0_i32, %c0_i32_0 : i32, i32, i32
  }
  func.func @transform_10(%arg0: i32) -> (i32, i32, i32, i32) {
    %c0_i32 = arith.constant 0 : i32
    %c0_i32_0 = arith.constant 0 : i32
    %c0_i32_1 = arith.constant 0 : i32
    %c0_i32_2 = arith.constant 0 : i32
    return %arg0, %c0_i32, %c0_i32_0, %c0_i32_1 : i32, i32, i32, i32
  }
}

</mosaic_0001>

<llo_original>
// kernel: tpu_custom_call.1
$region0: #{tpu_custom_call.1}
  #allocation0 [shape = 'u32[]', space=smem, size = 0x4, offset = 0x4, fixed_abs, tag = 'smem constant byte address 0x4 - core index']
  #allocation1 [shape = 'u32[72,128]{1,0:T(1,128)}', space=vmem, size = 0x9000, scoped, tag = 'internal scratch']
  #allocation2 [shape = 'bf16[2,8,32]{2,1,0:T(8,128)(2,1)}', space=vmem, size = 0x1000, scoped, tag = 'scratch operand']
  %s0 = inlined_call_operand.hbm [shape: f32[2,8,32], index: 0, kind: input, shape index: {}]
  %s1 = inlined_call_operand.hbm [shape: f32[2,8,32], index: 1, kind: input, shape index: {}]
  %s2 = inlined_call_operand.hbm [shape: f32[2,8,32], index: 2, kind: input, shape index: {}]
  %s3 = inlined_call_operand.hbm [shape: bf16[32,32], index: 3, kind: input, shape index: {}]
  %s4 = inlined_call_operand.hbm [shape: bf16[32,32], index: 4, kind: input, shape index: {}]
  %s5 = inlined_call_operand.hbm [shape: bf16[32,32], index: 5, kind: input, shape index: {}]
  %s6 = inlined_call_operand.hbm [shape: bf16[32,32], index: 6, kind: input, shape index: {}]
  %s7 = inlined_call_operand.vmem [shape: f32[1,32], index: 7, kind: input, shape index: {}]
  %s8 = inlined_call_operand.vmem [shape: f32[1,32], index: 8, kind: input, shape index: {}]
  %s9 = inlined_call_operand.hbm [shape: f32[2,8,32], index: 9, kind: output, shape index: {0}]
  %s10 = inlined_call_operand.hbm [shape: f32[2,4,8,8], index: 10, kind: output, shape index: {1}]
  %11 = xla_tuple %s9, %s10
  %s12 = sld [smem:[#allocation0]]
  $region82: #{tpu_custom_call.1} parent=0
    _
  %s14 = ssub.s32 1, %s12
  %s15 = scalar_select 0, %s14, %s12
  $region1: #{tpu_custom_call.1} parent=0
    #allocation3 [shape = 'u8[8192]{0}', space=vmem, size = 0x2000, scoped, tag = 'input window, operand 0, single buffered']
    #allocation4 [shape = 's32[1]{0}', space=sflag, size = 0x4, scoped, tag = 'scoped memory for tpu_custom_call.1']
    #allocation5 [shape = 's32[1]{0}', space=sflag, size = 0x4, scoped, tag = 'scoped memory for tpu_custom_call.1']
    #allocation6 [shape = 'u8[8192]{0}', space=vmem, size = 0x2000, scoped, tag = 'input window, operand 1, single buffered']
    #allocation7 [shape = 's32[1]{0}', space=sflag, size = 0x4, scoped, tag = 'scoped memory for tpu_custom_call.1']
    #allocation8 [shape = 'u8[8192]{0}', space=vmem, size = 0x2000, scoped, tag = 'input window, operand 2, single buffered']
    #allocation9 [shape = 'u8[8192]{0}', space=vmem, size = 0x2000, scoped, tag = 'input window, operand 3, single buffered']
    #allocation10 [shape = 's32[1]{0}', space=sflag, size = 0x4, scoped, tag = 'scoped memory for tpu_custom_call.1']
    #allocation11 [shape = 'u8[8192]{0}', space=vmem, size = 0x2000, scoped, tag = 'input window, operand 4, single buffered']
    #allocation12 [shape = 'u8[8192]{0}', space=vmem, size = 0x2000, scoped, tag = 'input window, operand 5, single buffered']
    #allocation13 [shape = 's32[1]{0}', space=sflag, size = 0x4, scoped, tag = 'scoped memory for tpu_custom_call.1']
    #allocation14 [shape = 'u8[8192]{0}', space=vmem, size = 0x2000, scoped, tag = 'input window, operand 6, single buffered']
    #allocation15 [shape = 'u8[8192]{0}', space=vmem, size = 0x2000, scoped, tag = 'output window, operand 0, single buffered']
    #allocation16 [shape = 'u8[32768]{0}', space=vmem, size = 0x8000, scoped, tag = 'output window, operand 1, single buffered']
    #allocation17 [shape = 's32[1]{0}', space=sflag, size = 0x4, scoped, tag = 'scoped memory for tpu_custom_call.1']
    %16 = vsyncpa [#allocation4], 0
    %17 = vsyncpa [#allocation7], 0
    %18 = vsyncpa [#allocation10], 0
    %19 = vsyncpa [#allocation13], 0
    %20 = vsyncpa [#allocation5], 0
    %21 = vsyncpa [#allocation17], 0
    // Predicated region
    $region2: #{tpu_custom_call.1} parent=1 // pred_check
      _
    $region3: #{tpu_custom_call.1} parent=1 // pred_check_branch
      %23 = sbr.rel (0) target = $region5
    $region4: #{tpu_custom_call.1} parent=1 // pred_region
      %25 = vsyncadd [#allocation4], 0
      %s26 = sshll.u32 %s0, 4
      %s27 = int_to_ptr.hbm [resolvable:$true] %s26
      %s28 = sshll.u32 [#allocation3], 4
      %s29 = int_to_ptr.vmem [resolvable:$true] %s28
      %34 = dma.hbm_to_vmem [thread:$0]  %s27, 256, %s29, [#allocation4], 128, 128, 8
    $region5: #{tpu_custom_call.1} parent=1 // pred_fallthru
      _
    // Predicated region
    $region6: #{tpu_custom_call.1} parent=1 // pred_check
      _
    $region7: #{tpu_custom_call.1} parent=1 // pred_check_branch
      %36 = sbr.rel (0) target = $region9
    $region8: #{tpu_custom_call.1} parent=1 // pred_region
      %38 = vsyncadd [#allocation7], 0
      %s39 = sshll.u32 %s1, 4
      %s40 = int_to_ptr.hbm [resolvable:$true] %s39
      %s41 = sshll.u32 [#allocation6], 4
      %s42 = int_to_ptr.vmem [resolvable:$true] %s41
      %47 = dma.hbm_to_vmem [thread:$0]  %s40, 256, %s42, [#allocation7], 128, 128, 8
    $region9: #{tpu_custom_call.1} parent=1 // pred_fallthru
      _
    // Predicated region
    $region10: #{tpu_custom_call.1} parent=1 // pred_check
      _
    $region11: #{tpu_custom_call.1} parent=1 // pred_check_branch
      %49 = sbr.rel (0) target = $region13
    $region12: #{tpu_custom_call.1} parent=1 // pred_region
      %51 = vsyncadd [#allocation7], 0
      %s52 = sshll.u32 %s2, 4
      %s53 = int_to_ptr.hbm [resolvable:$true] %s52
      %s54 = sshll.u32 [#allocation8], 4
      %s55 = int_to_ptr.vmem [resolvable:$true] %s54
      %60 = dma.hbm_to_vmem [thread:$0]  %s53, 256, %s55, [#allocation7], 128, 128, 8
    $region13: #{tpu_custom_call.1} parent=1 // pred_fallthru
      _
    // Predicated region
    $region14: #{tpu_custom_call.1} parent=1 // pred_check
      _
    $region15: #{tpu_custom_call.1} parent=1 // pred_check_branch
      %62 = sbr.rel (0) target = $region17
    $region16: #{tpu_custom_call.1} parent=1 // pred_region
      %64 = vsyncadd [#allocation10], 0
      %s65 = sshll.u32 %s3, 4
      %s66 = int_to_ptr.hbm [resolvable:$true] %s65
      %s67 = sshll.u32 [#allocation9], 4
      %s68 = int_to_ptr.vmem [resolvable:$true] %s67
      %73 = dma.hbm_to_vmem [thread:$0]  %s66, 256, %s68, [#allocation10], 64, 64, 4
    $region17: #{tpu_custom_call.1} parent=1 // pred_fallthru
      _
    // Predicated region
    $region18: #{tpu_custom_call.1} parent=1 // pred_check
      _
    $region19: #{tpu_custom_call.1} parent=1 // pred_check_branch
      %75 = sbr.rel (0) target = $region21
    $region20: #{tpu_custom_call.1} parent=1 // pred_region
      %77 = vsyncadd [#allocation10], 0
      %s78 = sshll.u32 %s4, 4
      %s79 = int_to_ptr.hbm [resolvable:$true] %s78
      %s80 = sshll.u32 [#allocation11], 4
      %s81 = int_to_ptr.vmem [resolvable:$true] %s80
      %86 = dma.hbm_to_vmem [thread:$0]  %s79, 256, %s81, [#allocation10], 64, 64, 4
    $region21: #{tpu_custom_call.1} parent=1 // pred_fallthru
      _
    // Predicated region
    $region22: #{tpu_custom_call.1} parent=1 // pred_check
      _
    $region23: #{tpu_custom_call.1} parent=1 // pred_check_branch
      %88 = sbr.rel (0) target = $region25
    $region24: #{tpu_custom_call.1} parent=1 // pred_region
      %90 = vsyncadd [#allocation13], 0
      %s91 = sshll.u32 %s5, 4
      %s92 = int_to_ptr.hbm [resolvable:$true] %s91
      %s93 = sshll.u32 [#allocation12], 4
      %s94 = int_to_ptr.vmem [resolvable:$true] %s93
      %99 = dma.hbm_to_vmem [thread:$0]  %s92, 256, %s94, [#allocation13], 64, 64, 4
    $region25: #{tpu_custom_call.1} parent=1 // pred_fallthru
      _
    // Predicated region
    $region26: #{tpu_custom_call.1} parent=1 // pred_check
      _
    $region27: #{tpu_custom_call.1} parent=1 // pred_check_branch
      %101 = sbr.rel (0) target = $region29
    $region28: #{tpu_custom_call.1} parent=1 // pred_region
      %103 = vsyncadd [#allocation13], 0
      %s104 = sshll.u32 %s6, 4
      %s105 = int_to_ptr.hbm [resolvable:$true] %s104
      %s106 = sshll.u32 [#allocation14], 4
      %s107 = int_to_ptr.vmem [resolvable:$true] %s106
      %112 = dma.hbm_to_vmem [thread:$0]  %s105, 256, %s107, [#allocation13], 64, 64, 4
    $region29: #{tpu_custom_call.1} parent=1 // pred_fallthru
      _
    // Predicated region
    $region30: #{tpu_custom_call.1} parent=1 // pred_check
      _
    $region31: #{tpu_custom_call.1} parent=1 // pred_check_branch
      %114 = sbr.rel (0) target = $region33
    $region32: #{tpu_custom_call.1} parent=1 // pred_region
      _
    $region33: #{tpu_custom_call.1} parent=1 // pred_fallthru
      _
    // Predicated region
    $region34: #{tpu_custom_call.1} parent=1 // pred_check
      _
    $region35: #{tpu_custom_call.1} parent=1 // pred_check_branch
      %116 = sbr.rel (0) target = $region37
    $region36: #{tpu_custom_call.1} parent=1 // pred_region
      _
    $region37: #{tpu_custom_call.1} parent=1 // pred_fallthru
      _
    // Predicated region
    $region38: #{tpu_custom_call.1} parent=1 // pred_check
      _
    $region39: #{tpu_custom_call.1} parent=1 // pred_check_branch
      %118 = sbr.rel (0) target = $region41
    $region40: #{tpu_custom_call.1} parent=1 // pred_region
      %120 = dma.done [#allocation4], 256
    $region41: #{tpu_custom_call.1} parent=1 // pred_fallthru
      _
    // Predicated region
    $region42: #{tpu_custom_call.1} parent=1 // pred_check
      _
    $region43: #{tpu_custom_call.1} parent=1 // pred_check_branch
      %122 = sbr.rel (0) target = $region45
    $region44: #{tpu_custom_call.1} parent=1 // pred_region
      %124 = dma.done [#allocation7], 256
    $region45: #{tpu_custom_call.1} parent=1 // pred_fallthru
      _
    // Predicated region
    $region46: #{tpu_custom_call.1} parent=1 // pred_check
      _
    $region47: #{tpu_custom_call.1} parent=1 // pred_check_branch
      %126 = sbr.rel (0) target = $region49
    $region48: #{tpu_custom_call.1} parent=1 // pred_region
      %128 = dma.done [#allocation7], 256
    $region49: #{tpu_custom_call.1} parent=1 // pred_fallthru
      _
    // Predicated region
    $region50: #{tpu_custom_call.1} parent=1 // pred_check
      _
    $region51: #{tpu_custom_call.1} parent=1 // pred_check_branch
      %130 = sbr.rel (0) target = $region53
    $region52: #{tpu_custom_call.1} parent=1 // pred_region
      %132 = dma.done [#allocation10], 256
    $region53: #{tpu_custom_call.1} parent=1 // pred_fallthru
      _
    // Predicated region
    $region54: #{tpu_custom_call.1} parent=1 // pred_check
      _
    $region55: #{tpu_custom_call.1} parent=1 // pred_check_branch
      %134 = sbr.rel (0) target = $region57
    $region56: #{tpu_custom_call.1} parent=1 // pred_region
      %136 = dma.done [#allocation10], 256
    $region57: #{tpu_custom_call.1} parent=1 // pred_fallthru
      _
    // Predicated region
    $region58: #{tpu_custom_call.1} parent=1 // pred_check
      _
    $region59: #{tpu_custom_call.1} parent=1 // pred_check_branch
      %138 = sbr.rel (0) target = $region61
    $region60: #{tpu_custom_call.1} parent=1 // pred_region
      %140 = dma.done [#allocation13], 256
    $region61: #{tpu_custom_call.1} parent=1 // pred_fallthru
      _
    // Predicated region
    $region62: #{tpu_custom_call.1} parent=1 // pred_check
      _
    $region63: #{tpu_custom_call.1} parent=1 // pred_check_branch
      %142 = sbr.rel (0) target = $region65
    $region64: #{tpu_custom_call.1} parent=1 // pred_region
      %144 = dma.done [#allocation13], 256
    $region65: #{tpu_custom_call.1} parent=1 // pred_fallthru
      _
    %v146 = vld [vmem:[#allocation3] sm:$0xff]
    %v147 = vld [vmem:[#allocation3 + $0x8] sm:$0xff]
    %v148 = vld [vmem:[#allocation6] sm:$0xff]
    %v149 = vld [vmem:[#allocation6 + $0x8] sm:$0xff]
    %v150 = vld [vmem:[#allocation8] sm:$0xff]
    %v151 = vld [vmem:[#allocation8 + $0x8] sm:$0xff]
    %v152 = vpack.c.bf16 %v147, %v146
    %v153 = vld [vmem:[#allocation9] sm:$0xf]
    %v154 = vld [vmem:[#allocation9 + $0x4] sm:$0xf]
    %v155 = vld [vmem:[#allocation9 + $0x8] sm:$0xf]
    %v156 = vld [vmem:[#allocation9 + $0xc] sm:$0xf]
    %v161 = vunpack.c.l.b16 %v153
    %v162 = vunpack.c.l.b16 %v154
    %v163 = vunpack.c.l.b16 %v155
    %v164 = vunpack.c.l.b16 %v156
    %v165 = vpack.c.b16 %v162, %v161
    %v166 = vpack.c.b16 %v164, %v163
    %vm169 = vcmask 261120
    %v171 = vsel %vm169, %v152, 0
    %173 = vmatpush.bf16.msra.mxu0 0
    %174 = vmatpush.bf16.msra.mxu0 0
    %175 = vmatpush.bf16.msra.mxu0 0
    %176 = vmatpush.bf16.msra.mxu0 0
    %177 = vmatpush.bf16.msra.mxu0 0
    %178 = vmatpush.bf16.msra.mxu0 0
    %179 = vmatpush.bf16.msra.mxu0 %v166
    %180 = vmatpush.bf16.msra.mxu0 %v165
    %181 = vmatmul.bf16.gmra.mxu0 %v171
    %v182 = vpop.f32.mrf.mxu0
    %v183 = vadd.f32 0.0, %v182
    %v184 = vpop.f32.mrf.mxu0
    %v185 = vadd.f32 0.0, %v184
    %186 = vdwg.mxu0
    %v187 = vpack.c.bf16 %v149, %v148
    %v188 = vld [vmem:[#allocation11] sm:$0xf]
    %v189 = vld [vmem:[#allocation11 + $0x4] sm:$0xf]
    %v190 = vld [vmem:[#allocation11 + $0x8] sm:$0xf]
    %v191 = vld [vmem:[#allocation11 + $0xc] sm:$0xf]
    %v196 = vunpack.c.l.b16 %v188
    %v197 = vunpack.c.l.b16 %v189
    %v198 = vunpack.c.l.b16 %v190
    %v199 = vunpack.c.l.b16 %v191
    %v200 = vpack.c.b16 %v197, %v196
    %v201 = vpack.c.b16 %v199, %v198
    %v205 = vsel %vm169, %v187, 0
    %207 = vmatpush.bf16.msra.mxu0 0
    %208 = vmatpush.bf16.msra.mxu0 0
    %209 = vmatpush.bf16.msra.mxu0 0
    %210 = vmatpush.bf16.msra.mxu0 0
    %211 = vmatpush.bf16.msra.mxu0 0
    %212 = vmatpush.bf16.msra.mxu0 0
    %213 = vmatpush.bf16.msra.mxu0 %v201
    %214 = vmatpush.bf16.msra.mxu0 %v200
    %215 = vmatmul.bf16.gmra.mxu0 %v205
    %v216 = vpop.f32.mrf.mxu0
    %v217 = vadd.f32 0.0, %v216
    %v218 = vpop.f32.mrf.mxu0
    %v219 = vadd.f32 0.0, %v218
    %220 = vdwg.mxu0
    %v221 = vpack.c.bf16 %v151, %v150
    %v222 = vld [vmem:[#allocation12] sm:$0xf]
    %v223 = vld [vmem:[#allocation12 + $0x4] sm:$0xf]
    %v224 = vld [vmem:[#allocation12 + $0x8] sm:$0xf]
    %v225 = vld [vmem:[#allocation12 + $0xc] sm:$0xf]
    %v230 = vunpack.c.l.b16 %v222
    %v231 = vunpack.c.l.b16 %v223
    %v232 = vunpack.c.l.b16 %v224
    %v233 = vunpack.c.l.b16 %v225
    %v234 = vpack.c.b16 %v231, %v230
    %v235 = vpack.c.b16 %v233, %v232
    %v239 = vsel %vm169, %v221, 0
    %241 = vmatpush.bf16.msra.mxu0 0
    %242 = vmatpush.bf16.msra.mxu0 0
    %243 = vmatpush.bf16.msra.mxu0 0
    %244 = vmatpush.bf16.msra.mxu0 0
    %245 = vmatpush.bf16.msra.mxu0 0
    %246 = vmatpush.bf16.msra.mxu0 0
    %247 = vmatpush.bf16.msra.mxu0 %v235
    %248 = vmatpush.bf16.msra.mxu0 %v234
    %249 = vmatmul.bf16.gmra.mxu0 %v239
    %v250 = vpop.f32.mrf.mxu0
    %v251 = vadd.f32 0.0, %v250
    %v252 = vpop.f32.mrf.mxu0
    %v253 = vadd.f32 0.0, %v252
    %254 = vdwg.mxu0
    %v255 = vpack.c.bf16 %v183, %v183
    %v256 = vpack.c.bf16 %v185, %v185
    %v257 = vpack.c.bf16 %v217, %v217
    %v258 = vpack.c.bf16 %v219, %v219
    %v259 = vpack.c.bf16 %v251, %v251
    %v260 = vpack.c.bf16 %v253, %v253
    %vm261 = vcmask 64512
    %v263 = vsel %vm261, %v255, 0
    %v266 = vsel %vm261, %v257, 0
    %268 = vmatpush.bf16.xpose.msra.mxu0 0
    %269 = vmatpush.bf16.xpose.msra.mxu0 0
    %270 = vmatpush.bf16.xpose.msra.mxu0 0
    %271 = vmatpush.bf16.xpose.msra.mxu0 0
    %272 = vmatpush.bf16.xpose.msra.mxu0 0
    %273 = vmatpush.bf16.xpose.msra.mxu0 0
    %274 = vmatpush.bf16.xpose.msra.mxu0 0
    %275 = vmatpush.bf16.xpose.msra.mxu0 %v266
    %276 = vmatmul.bf16.gmra.mxu0 %v263
    %v277 = vpop.f32.mrf.mxu0
    %v278 = vadd.f32 0.0, %v277
    %v279 = vpop.f32.mrf.mxu0
    %280 = vdwg.mxu0
    %v282 = vsel %vm261, %v256, 0
    %v285 = vsel %vm261, %v258, 0
    %287 = vmatpush.bf16.xpose.msra.mxu0 0
    %288 = vmatpush.bf16.xpose.msra.mxu0 0
    %289 = vmatpush.bf16.xpose.msra.mxu0 0
    %290 = vmatpush.bf16.xpose.msra.mxu0 0
    %291 = vmatpush.bf16.xpose.msra.mxu0 0
    %292 = vmatpush.bf16.xpose.msra.mxu0 0
    %293 = vmatpush.bf16.xpose.msra.mxu0 0
    %294 = vmatpush.bf16.xpose.msra.mxu0 %v285
    %295 = vmatmul.bf16.gmra.mxu0 %v282
    %v296 = vpop.f32.mrf.mxu0
    %v297 = vadd.f32 0.0, %v296
    %v298 = vpop.f32.mrf.mxu0
    %299 = vdwg.mxu0
    %v300 = vsel %vm261, %v278, -inf
    %301 = vmax.xlane.f32.xlu0 %v300
    %v302 = vpop.xlane.xlu0 %301
    %v303 = vsel %vm261, %v297, -inf
    %304 = vmax.xlane.f32.xlu0 %v303
    %v305 = vpop.xlane.xlu0 %304
    %v306 = vsub.f32 %v278, %v302
    %v307 = vsub.f32 %v297, %v305
    %v308 = vmul.f32 %v306, 1.442695
    %v309 = vpow.pop %v308
    %v310 = vmul.f32 %v307, 1.442695
    %v311 = vpow.pop %v310
    %v312 = vsel %vm261, %v309, 0.0
    %313 = vadd.xlane.f32.xlu0 %v312
    %v314 = vpop.xlane.xlu0 %313
    %v315 = vsel %vm261, %v311, 0.0
    %316 = vadd.xlane.f32.xlu0 %v315
    %v317 = vpop.xlane.xlu0 %316
    %v318 = vrcp.pop %v314
    %v319 = vrcp.pop %v317
    %v320 = vmul.f32 %v309, %v318
    %v321 = vmul.f32 %v311, %v319
    %322 = vst.msk [vmem:[#allocation16] sm:$0xff] %vm261, %v320
    %323 = vst.msk [vmem:[#allocation16 + $0x20] sm:$0xff] %vm261, %v321
    %v324 = vpack.c.bf16 %v320, %v320
    %v325 = vpack.c.bf16 %v321, %v321
    %v327 = vsel %vm261, %v324, 0
    %vm329 = vcmask 1043456
    %v331 = vsel %vm329, %v259, 0
    %333 = vmatpush.bf16.msra.mxu0 0
    %334 = vmatpush.bf16.msra.mxu0 0
    %335 = vmatpush.bf16.msra.mxu0 0
    %336 = vmatpush.bf16.msra.mxu0 0
    %337 = vmatpush.bf16.msra.mxu0 0
    %338 = vmatpush.bf16.msra.mxu0 0
    %339 = vmatpush.bf16.msra.mxu0 0
    %340 = vmatpush.bf16.msra.mxu0 %v331
    %341 = vmatmul.bf16.gmra.mxu0 %v327
    %v342 = vpop.f32.mrf.mxu0
    %v343 = vadd.f32 0.0, %v342
    %v344 = vpop.f32.mrf.mxu0
    %345 = vdwg.mxu0
    %v347 = vsel %vm261, %v325, 0
    %v350 = vsel %vm329, %v260, 0
    %352 = vmatpush.bf16.msra.mxu0 0
    %353 = vmatpush.bf16.msra.mxu0 0
    %354 = vmatpush.bf16.msra.mxu0 0
    %355 = vmatpush.bf16.msra.mxu0 0
    %356 = vmatpush.bf16.msra.mxu0 0
    %357 = vmatpush.bf16.msra.mxu0 0
    %358 = vmatpush.bf16.msra.mxu0 0
    %359 = vmatpush.bf16.msra.mxu0 %v350
    %360 = vmatmul.bf16.gmra.mxu0 %v347
    %v361 = vpop.f32.mrf.mxu0
    %v362 = vadd.f32 0.0, %v361
    %v363 = vpop.f32.mrf.mxu0
    %364 = vdwg.mxu0
    %v365 = vpack.c.bf16 %v343, %v343
    %v366 = vpack.c.bf16 %v362, %v362
    %vm367 = vcmask 60416
    %368 = vst.msk [vmem:[#allocation2] sm:$0xf] %vm367, %v365
    %369 = vst.msk [vmem:[#allocation2 + $0x4] sm:$0xf] %vm367, %v366
    %v371 = vunpack.c.l.b16 %v255
    %v372 = vpack.c.b16 %v371, %v371
    %373 = vrot.lane.b32.xlu0 %v372, 120
    %v374 = vpop.permute.xlu0 %373
    %v376 = vunpack.c.l.b16 %v257
    %v377 = vpack.c.b16 %v376, %v376
    %378 = vrot.lane.b32.xlu0 %v377, 120
    %v379 = vpop.permute.xlu0 %378
    %v381 = vsel %vm261, %v374, 0
    %v384 = vsel %vm261, %v379, 0
    %386 = vmatpush.bf16.xpose.msra.mxu0 0
    %387 = vmatpush.bf16.xpose.msra.mxu0 0
    %388 = vmatpush.bf16.xpose.msra.mxu0 0
    %389 = vmatpush.bf16.xpose.msra.mxu0 0
    %390 = vmatpush.bf16.xpose.msra.mxu0 0
    %391 = vmatpush.bf16.xpose.msra.mxu0 0
    %392 = vmatpush.bf16.xpose.msra.mxu0 0
    %393 = vmatpush.bf16.xpose.msra.mxu0 %v384
    %394 = vmatmul.bf16.gmra.mxu0 %v381
    %v395 = vpop.f32.mrf.mxu0
    %v396 = vadd.f32 0.0, %v395
    %v397 = vpop.f32.mrf.mxu0
    %398 = vdwg.mxu0
    %v400 = vunpack.c.l.b16 %v256
    %v401 = vpack.c.b16 %v400, %v400
    %402 = vrot.lane.b32.xlu0 %v401, 120
    %v403 = vpop.permute.xlu0 %402
    %v405 = vunpack.c.l.b16 %v258
    %v406 = vpack.c.b16 %v405, %v405
    %407 = vrot.lane.b32.xlu0 %v406, 120
    %v408 = vpop.permute.xlu0 %407
    %v410 = vsel %vm261, %v403, 0
    %v413 = vsel %vm261, %v408, 0
    %415 = vmatpush.bf16.xpose.msra.mxu0 0
    %416 = vmatpush.bf16.xpose.msra.mxu0 0
    %417 = vmatpush.bf16.xpose.msra.mxu0 0
    %418 = vmatpush.bf16.xpose.msra.mxu0 0
    %419 = vmatpush.bf16.xpose.msra.mxu0 0
    %420 = vmatpush.bf16.xpose.msra.mxu0 0
    %421 = vmatpush.bf16.xpose.msra.mxu0 0
    %422 = vmatpush.bf16.xpose.msra.mxu0 %v413
    %423 = vmatmul.bf16.gmra.mxu0 %v410
    %v424 = vpop.f32.mrf.mxu0
    %v425 = vadd.f32 0.0, %v424
    %v426 = vpop.f32.mrf.mxu0
    %427 = vdwg.mxu0
    %v428 = vsel %vm261, %v396, -inf
    %429 = vmax.xlane.f32.xlu0 %v428
    %v430 = vpop.xlane.xlu0 %429
    %v431 = vsel %vm261, %v425, -inf
    %432 = vmax.xlane.f32.xlu0 %v431
    %v433 = vpop.xlane.xlu0 %432
    %v434 = vsub.f32 %v396, %v430
    %v435 = vsub.f32 %v425, %v433
    %v436 = vmul.f32 %v434, 1.442695
    %v437 = vpow.pop %v436
    %v438 = vmul.f32 %v435, 1.442695
    %v439 = vpow.pop %v438
    %v440 = vsel %vm261, %v437, 0.0
    %441 = vadd.xlane.f32.xlu0 %v440
    %v442 = vpop.xlane.xlu0 %441
    %v443 = vsel %vm261, %v439, 0.0
    %444 = vadd.xlane.f32.xlu0 %v443
    %v445 = vpop.xlane.xlu0 %444
    %v446 = vrcp.pop %v442
    %v447 = vrcp.pop %v445
    %v448 = vmul.f32 %v437, %v446
    %v449 = vmul.f32 %v439, %v447
    %s450 = scalar_lea.vmem [#allocation16], 8
    %451 = vst.msk [vmem:[%s450] sm:$0xff] %vm261, %v448
    %452 = vst.msk [vmem:[%s450 + $0x20] sm:$0xff] %vm261, %v449
    %v453 = vpack.c.bf16 %v448, %v448
    %v454 = vpack.c.bf16 %v449, %v449
    %v456 = vunpack.c.l.b16 %v259
    %v457 = vpack.c.b16 %v456, %v456
    %458 = vrot.lane.b32.xlu0 %v457, 120
    %v459 = vpop.permute.xlu0 %458
    %v461 = vsel %vm261, %v453, 0
    %v464 = vsel %vm329, %v459, 0
    %466 = vmatpush.bf16.msra.mxu0 0
    %467 = vmatpush.bf16.msra.mxu0 0
    %468 = vmatpush.bf16.msra.mxu0 0
    %469 = vmatpush.bf16.msra.mxu0 0
    %470 = vmatpush.bf16.msra.mxu0 0
    %471 = vmatpush.bf16.msra.mxu0 0
    %472 = vmatpush.bf16.msra.mxu0 0
    %473 = vmatpush.bf16.msra.mxu0 %v464
    %474 = vmatmul.bf16.gmra.mxu0 %v461
    %v475 = vpop.f32.mrf.mxu0
    %v476 = vadd.f32 0.0, %v475
    %v477 = vpop.f32.mrf.mxu0
    %478 = vdwg.mxu0
    %v480 = vunpack.c.l.b16 %v260
    %v481 = vpack.c.b16 %v480, %v480
    %482 = vrot.lane.b32.xlu0 %v481, 120
    %v483 = vpop.permute.xlu0 %482
    %v485 = vsel %vm261, %v454, 0
    %v488 = vsel %vm329, %v483, 0
    %490 = vmatpush.bf16.msra.mxu0 0
    %491 = vmatpush.bf16.msra.mxu0 0
    %492 = vmatpush.bf16.msra.mxu0 0
    %493 = vmatpush.bf16.msra.mxu0 0
    %494 = vmatpush.bf16.msra.mxu0 0
    %495 = vmatpush.bf16.msra.mxu0 0
    %496 = vmatpush.bf16.msra.mxu0 0
    %497 = vmatpush.bf16.msra.mxu0 %v488
    %498 = vmatmul.bf16.gmra.mxu0 %v485
    %v499 = vpop.f32.mrf.mxu0
    %v500 = vadd.f32 0.0, %v499
    %v501 = vpop.f32.mrf.mxu0
    %502 = vdwg.mxu0
    %v503 = vpack.c.bf16 %v476, %v476
    %v504 = vpack.c.bf16 %v500, %v500
    %507 = vrot.lane.b32.xlu0 %v503, 8
    %v508 = vpop.permute.xlu0 %507
    %509 = vrot.lane.b32.xlu0 %v504, 8
    %v510 = vpop.permute.xlu0 %509
    %vm513 = vcmask 126016
    %514 = vst.msk [vmem:[#allocation2] sm:$0xf] %vm513, %v508
    %515 = vst.msk [vmem:[#allocation2 + $0x4] sm:$0xf] %vm513, %v510
    %516 = vrot.lane.b32.xlu0 %v372, 112
    %v517 = vpop.permute.xlu0 %516
    %518 = vrot.lane.b32.xlu0 %v377, 112
    %v519 = vpop.permute.xlu0 %518
    %v521 = vsel %vm261, %v517, 0
    %v524 = vsel %vm261, %v519, 0
    %526 = vmatpush.bf16.xpose.msra.mxu0 0
    %527 = vmatpush.bf16.xpose.msra.mxu0 0
    %528 = vmatpush.bf16.xpose.msra.mxu0 0
    %529 = vmatpush.bf16.xpose.msra.mxu0 0
    %530 = vmatpush.bf16.xpose.msra.mxu0 0
    %531 = vmatpush.bf16.xpose.msra.mxu0 0
    %532 = vmatpush.bf16.xpose.msra.mxu0 0
    %533 = vmatpush.bf16.xpose.msra.mxu0 %v524
    %534 = vmatmul.bf16.gmra.mxu0 %v521
    %v535 = vpop.f32.mrf.mxu0
    %v536 = vadd.f32 0.0, %v535
    %v537 = vpop.f32.mrf.mxu0
    %538 = vdwg.mxu0
    %539 = vrot.lane.b32.xlu0 %v401, 112
    %v540 = vpop.permute.xlu0 %539
    %541 = vrot.lane.b32.xlu0 %v406, 112
    %v542 = vpop.permute.xlu0 %541
    %v544 = vsel %vm261, %v540, 0
    %v547 = vsel %vm261, %v542, 0
    %549 = vmatpush.bf16.xpose.msra.mxu0 0
    %550 = vmatpush.bf16.xpose.msra.mxu0 0
    %551 = vmatpush.bf16.xpose.msra.mxu0 0
    %552 = vmatpush.bf16.xpose.msra.mxu0 0
    %553 = vmatpush.bf16.xpose.msra.mxu0 0
    %554 = vmatpush.bf16.xpose.msra.mxu0 0
    %555 = vmatpush.bf16.xpose.msra.mxu0 0
    %556 = vmatpush.bf16.xpose.msra.mxu0 %v547
    %557 = vmatmul.bf16.gmra.mxu0 %v544
    %v558 = vpop.f32.mrf.mxu0
    %v559 = vadd.f32 0.0, %v558
    %v560 = vpop.f32.mrf.mxu0
    %561 = vdwg.mxu0
    %v562 = vsel %vm261, %v536, -inf
    %563 = vmax.xlane.f32.xlu0 %v562
    %v564 = vpop.xlane.xlu0 %563
    %v565 = vsel %vm261, %v559, -inf
    %566 = vmax.xlane.f32.xlu0 %v565
    %v567 = vpop.xlane.xlu0 %566
    %v568 = vsub.f32 %v536, %v564
    %v569 = vsub.f32 %v559, %v567
    %v570 = vmul.f32 %v568, 1.442695
    %v571 = vpow.pop %v570
    %v572 = vmul.f32 %v569, 1.442695
    %v573 = vpow.pop %v572
    %v574 = vsel %vm261, %v571, 0.0
    %575 = vadd.xlane.f32.xlu0 %v574
    %v576 = vpop.xlane.xlu0 %575
    %v577 = vsel %vm261, %v573, 0.0
    %578 = vadd.xlane.f32.xlu0 %v577
    %v579 = vpop.xlane.xlu0 %578
    %v580 = vrcp.pop %v576
    %v581 = vrcp.pop %v579
    %v582 = vmul.f32 %v571, %v580
    %v583 = vmul.f32 %v573, %v581
    %s584 = scalar_lea.vmem [#allocation16], 16
    %585 = vst.msk [vmem:[%s584] sm:$0xff] %vm261, %v582
    %586 = vst.msk [vmem:[%s584 + $0x20] sm:$0xff] %vm261, %v583
    %v587 = vpack.c.bf16 %v582, %v582
    %v588 = vpack.c.bf16 %v583, %v583
    %589 = vrot.lane.b32.xlu0 %v457, 112
    %v590 = vpop.permute.xlu0 %589
    %v592 = vsel %vm261, %v587, 0
    %v595 = vsel %vm329, %v590, 0
    %597 = vmatpush.bf16.msra.mxu0 0
    %598 = vmatpush.bf16.msra.mxu0 0
    %599 = vmatpush.bf16.msra.mxu0 0
    %600 = vmatpush.bf16.msra.mxu0 0
    %601 = vmatpush.bf16.msra.mxu0 0
    %602 = vmatpush.bf16.msra.mxu0 0
    %603 = vmatpush.bf16.msra.mxu0 0
    %604 = vmatpush.bf16.msra.mxu0 %v595
    %605 = vmatmul.bf16.gmra.mxu0 %v592
    %v606 = vpop.f32.mrf.mxu0
    %v607 = vadd.f32 0.0, %v606
    %v608 = vpop.f32.mrf.mxu0
    %609 = vdwg.mxu0
    %610 = vrot.lane.b32.xlu0 %v481, 112
    %v611 = vpop.permute.xlu0 %610
    %v613 = vsel %vm261, %v588, 0
    %v616 = vsel %vm329, %v611, 0
    %618 = vmatpush.bf16.msra.mxu0 0
    %619 = vmatpush.bf16.msra.mxu0 0
    %620 = vmatpush.bf16.msra.mxu0 0
    %621 = vmatpush.bf16.msra.mxu0 0
    %622 = vmatpush.bf16.msra.mxu0 0
    %623 = vmatpush.bf16.msra.mxu0 0
    %624 = vmatpush.bf16.msra.mxu0 0
    %625 = vmatpush.bf16.msra.mxu0 %v616
    %626 = vmatmul.bf16.gmra.mxu0 %v613
    %v627 = vpop.f32.mrf.mxu0
    %v628 = vadd.f32 0.0, %v627
    %v629 = vpop.f32.mrf.mxu0
    %630 = vdwg.mxu0
    %v631 = vpack.c.bf16 %v607, %v607
    %v632 = vpack.c.bf16 %v628, %v628
    %635 = vrot.lane.b32.xlu0 %v631, 16
    %v636 = vpop.permute.xlu0 %635
    %637 = vrot.lane.b32.xlu0 %v632, 16
    %v638 = vpop.permute.xlu0 %637
    %vm641 = vcmask 191616
    %642 = vst.msk [vmem:[#allocation2] sm:$0xf] %vm641, %v636
    %643 = vst.msk [vmem:[#allocation2 + $0x4] sm:$0xf] %vm641, %v638
    %644 = vrot.lane.b32.xlu0 %v372, 104
    %v645 = vpop.permute.xlu0 %644
    %646 = vrot.lane.b32.xlu0 %v377, 104
    %v647 = vpop.permute.xlu0 %646
    %v649 = vsel %vm261, %v645, 0
    %v652 = vsel %vm261, %v647, 0
    %654 = vmatpush.bf16.xpose.msra.mxu0 0
    %655 = vmatpush.bf16.xpose.msra.mxu0 0
    %656 = vmatpush.bf16.xpose.msra.mxu0 0
    %657 = vmatpush.bf16.xpose.msra.mxu0 0
    %658 = vmatpush.bf16.xpose.msra.mxu0 0
    %659 = vmatpush.bf16.xpose.msra.mxu0 0
    %660 = vmatpush.bf16.xpose.msra.mxu0 0
    %661 = vmatpush.bf16.xpose.msra.mxu0 %v652
    %662 = vmatmul.bf16.gmra.mxu0 %v649
    %v663 = vpop.f32.mrf.mxu0
    %v664 = vadd.f32 0.0, %v663
    %v665 = vpop.f32.mrf.mxu0
    %666 = vdwg.mxu0
    %667 = vrot.lane.b32.xlu0 %v401, 104
    %v668 = vpop.permute.xlu0 %667
    %669 = vrot.lane.b32.xlu0 %v406, 104
    %v670 = vpop.permute.xlu0 %669
    %v672 = vsel %vm261, %v668, 0
    %v675 = vsel %vm261, %v670, 0
    %677 = vmatpush.bf16.xpose.msra.mxu0 0
    %678 = vmatpush.bf16.xpose.msra.mxu0 0
    %679 = vmatpush.bf16.xpose.msra.mxu0 0
    %680 = vmatpush.bf16.xpose.msra.mxu0 0
    %681 = vmatpush.bf16.xpose.msra.mxu0 0
    %682 = vmatpush.bf16.xpose.msra.mxu0 0
    %683 = vmatpush.bf16.xpose.msra.mxu0 0
    %684 = vmatpush.bf16.xpose.msra.mxu0 %v675
    %685 = vmatmul.bf16.gmra.mxu0 %v672
    %v686 = vpop.f32.mrf.mxu0
    %v687 = vadd.f32 0.0, %v686
    %v688 = vpop.f32.mrf.mxu0
    %689 = vdwg.mxu0
    %v690 = vsel %vm261, %v664, -inf
    %691 = vmax.xlane.f32.xlu0 %v690
    %v692 = vpop.xlane.xlu0 %691
    %v693 = vsel %vm261, %v687, -inf
    %694 = vmax.xlane.f32.xlu0 %v693
    %v695 = vpop.xlane.xlu0 %694
    %v696 = vsub.f32 %v664, %v692
    %v697 = vsub.f32 %v687, %v695
    %v698 = vmul.f32 %v696, 1.442695
    %v699 = vpow.pop %v698
    %v700 = vmul.f32 %v697, 1.442695
    %v701 = vpow.pop %v700
    %v702 = vsel %vm261, %v699, 0.0
    %703 = vadd.xlane.f32.xlu0 %v702
    %v704 = vpop.xlane.xlu0 %703
    %v705 = vsel %vm261, %v701, 0.0
    %706 = vadd.xlane.f32.xlu0 %v705
    %v707 = vpop.xlane.xlu0 %706
    %v708 = vrcp.pop %v704
    %v709 = vrcp.pop %v707
    %v710 = vmul.f32 %v699, %v708
    %v711 = vmul.f32 %v701, %v709
    %s712 = scalar_lea.vmem [#allocation16], 24
    %713 = vst.msk [vmem:[%s712] sm:$0xff] %vm261, %v710
    %714 = vst.msk [vmem:[%s712 + $0x20] sm:$0xff] %vm261, %v711
    %v715 = vpack.c.bf16 %v710, %v710
    %v716 = vpack.c.bf16 %v711, %v711
    %717 = vrot.lane.b32.xlu0 %v457, 104
    %v718 = vpop.permute.xlu0 %717
    %v720 = vsel %vm261, %v715, 0
    %v723 = vsel %vm329, %v718, 0
    %725 = vmatpush.bf16.msra.mxu0 0
    %726 = vmatpush.bf16.msra.mxu0 0
    %727 = vmatpush.bf16.msra.mxu0 0
    %728 = vmatpush.bf16.msra.mxu0 0
    %729 = vmatpush.bf16.msra.mxu0 0
    %730 = vmatpush.bf16.msra.mxu0 0
    %731 = vmatpush.bf16.msra.mxu0 0
    %732 = vmatpush.bf16.msra.mxu0 %v723
    %733 = vmatmul.bf16.gmra.mxu0 %v720
    %v734 = vpop.f32.mrf.mxu0
    %v735 = vadd.f32 0.0, %v734
    %v736 = vpop.f32.mrf.mxu0
    %737 = vdwg.mxu0
    %738 = vrot.lane.b32.xlu0 %v481, 104
    %v739 = vpop.permute.xlu0 %738
    %v741 = vsel %vm261, %v716, 0
    %v744 = vsel %vm329, %v739, 0
    %746 = vmatpush.bf16.msra.mxu0 0
    %747 = vmatpush.bf16.msra.mxu0 0
    %748 = vmatpush.bf16.msra.mxu0 0
    %749 = vmatpush.bf16.msra.mxu0 0
    %750 = vmatpush.bf16.msra.mxu0 0
    %751 = vmatpush.bf16.msra.mxu0 0
    %752 = vmatpush.bf16.msra.mxu0 0
    %753 = vmatpush.bf16.msra.mxu0 %v744
    %754 = vmatmul.bf16.gmra.mxu0 %v741
    %v755 = vpop.f32.mrf.mxu0
    %v756 = vadd.f32 0.0, %v755
    %v757 = vpop.f32.mrf.mxu0
    %758 = vdwg.mxu0
    %v759 = vpack.c.bf16 %v735, %v735
    %v760 = vpack.c.bf16 %v756, %v756
    %763 = vrot.lane.b32.xlu0 %v759, 24
    %v764 = vpop.permute.xlu0 %763
    %765 = vrot.lane.b32.xlu0 %v760, 24
    %v766 = vpop.permute.xlu0 %765
    %vm769 = vcmask 257216
    %770 = vst.msk [vmem:[#allocation2] sm:$0xf] %vm769, %v764
    %771 = vst.msk [vmem:[#allocation2 + $0x4] sm:$0xf] %vm769, %v766
    %v772 = vld [vmem:[#allocation2] sm:$0xf]
    %v773 = vld [vmem:[#allocation2 + $0x4] sm:$0xf]
    %v774 = vld [vmem:[#allocation14] sm:$0xf]
    %v775 = vld [vmem:[#allocation14 + $0x4] sm:$0xf]
    %v776 = vld [vmem:[#allocation14 + $0x8] sm:$0xf]
    %v777 = vld [vmem:[#allocation14 + $0xc] sm:$0xf]
    %v780 = vunpack.c.l.b16 %v772
    %v781 = vunpack.c.l.b16 %v773
    %v782 = vpack.c.b16 %v781, %v780
    %v787 = vunpack.c.l.b16 %v774
    %v788 = vunpack.c.l.b16 %v775
    %v789 = vunpack.c.l.b16 %v776
    %v790 = vunpack.c.l.b16 %v777
    %v791 = vpack.c.b16 %v788, %v787
    %v792 = vpack.c.b16 %v790, %v789
    %v796 = vsel %vm169, %v782, 0
    %798 = vmatpush.bf16.msra.mxu0 0
    %799 = vmatpush.bf16.msra.mxu0 0
    %800 = vmatpush.bf16.msra.mxu0 0
    %801 = vmatpush.bf16.msra.mxu0 0
    %802 = vmatpush.bf16.msra.mxu0 0
    %803 = vmatpush.bf16.msra.mxu0 0
    %804 = vmatpush.bf16.msra.mxu0 %v792
    %805 = vmatpush.bf16.msra.mxu0 %v791
    %806 = vmatmul.bf16.gmra.mxu0 %v796
    %v807 = vpop.f32.mrf.mxu0
    %v808 = vadd.f32 %v146, %v807
    %v809 = vpop.f32.mrf.mxu0
    %v810 = vadd.f32 %v147, %v809
    %811 = vdwg.mxu0
    %v812 = vsel %vm169, %v808, 0.0
    %813 = vadd.xlane.f32.xlu0 %v812
    %v814 = vpop.xlane.xlu0 %813
    %v815 = vsel %vm169, %v810, 0.0
    %816 = vadd.xlane.f32.xlu0 %v815
    %v817 = vpop.xlane.xlu0 %816
    %v818 = vrcp.pop 32.0
    %v819 = vmul.f32 32.0, %v818
    %v820 = vsub.f32 1.0, %v819
    %v821 = vmul.f32 %v818, %v820
    %v822 = vadd.f32 %v818, %v821
    %vm823 = vweird.f32 %v818
    %v824 = vsel %vm823, %v818, %v822
    %v825 = vmul.f32 %v814, %v824
    %v826 = vmul.f32 %v817, %v824
    %v827 = vsub.f32 %v808, %v825
    %v828 = vsub.f32 %v810, %v826
    %v829 = vmul.f32 %v827, %v827
    %v830 = vmul.f32 %v828, %v828
    %v831 = vsel %vm169, %v829, 0.0
    %832 = vadd.xlane.f32.xlu0 %v831
    %v833 = vpop.xlane.xlu0 %832
    %v834 = vsel %vm169, %v830, 0.0
    %835 = vadd.xlane.f32.xlu0 %v834
    %v836 = vpop.xlane.xlu0 %835
    %v837 = vmul.f32 %v833, %v824
    %v838 = vmul.f32 %v836, %v824
    %v839 = vadd.f32 %v837, 1e-06
    %v840 = vadd.f32 %v838, 1e-06
    %v841 = vrsqrt.pop %v839
    %v842 = vmul.f32 %v841, %v839
    %v843 = vmul.f32 %v842, %v841
    %v844 = vmul.f32 0.5, %v843
    %v845 = vsub.f32 1.5, %v844
    %v846 = vmul.f32 %v841, %v845
    %vm847 = vweird.f32 %v839
    %vm848 = vweird.f32 %v841
    %vm849 = vmor %vm847, %vm848
    %v850 = vsel %vm849, %v841, %v846
    %v851 = vrsqrt.pop %v840
    %v852 = vmul.f32 %v851, %v840
    %v853 = vmul.f32 %v852, %v851
    %v854 = vmul.f32 0.5, %v853
    %v855 = vsub.f32 1.5, %v854
    %v856 = vmul.f32 %v851, %v855
    %vm857 = vweird.f32 %v840
    %vm858 = vweird.f32 %v851
    %vm859 = vmor %vm857, %vm858
    %v860 = vsel %vm859, %v851, %v856
    %v861 = vmul.f32 %v827, %v850
    %v862 = vmul.f32 %v828, %v860
    %v863 = vld [vmem:[%s7] sm:$0x1]
    %v865 = vperm.slane %v863, 0
    %v867 = vmul.f32 %v861, %v865
    %v868 = vmul.f32 %v862, %v865
    %v869 = vld [vmem:[%s8] sm:$0x1]
    %v871 = vperm.slane %v869, 0
    %v873 = vadd.f32 %v867, %v871
    %v874 = vadd.f32 %v868, %v871
    %875 = vst.msk [vmem:[#allocation15] sm:$0xff] %vm169, %v873
    %876 = vst.msk [vmem:[#allocation15 + $0x8] sm:$0xff] %vm169, %v874
    // Predicated region
    $region66: #{tpu_custom_call.1} parent=1 // pred_check
      _
    $region67: #{tpu_custom_call.1} parent=1 // pred_check_branch
      %878 = sbr.rel (0) target = $region69
    $region68: #{tpu_custom_call.1} parent=1 // pred_region
      %880 = vsyncadd [#allocation5], 0
      %s881 = sshll.u32 [#allocation15], 4
      %s882 = int_to_ptr.vmem [resolvable:$true] %s881
      %s883 = sshll.u32 %s9, 4
      %s884 = int_to_ptr.hbm [resolvable:$true] %s883
      %889 = dma.vmem_to_hbm [thread:$0]  %s882, 256, %s884, [#allocation5], 128, 128, 8
    $region69: #{tpu_custom_call.1} parent=1 // pred_fallthru
      _
    // Predicated region
    $region70: #{tpu_custom_call.1} parent=1 // pred_check
      _
    $region71: #{tpu_custom_call.1} parent=1 // pred_check_branch
      %891 = sbr.rel (0) target = $region73
    $region72: #{tpu_custom_call.1} parent=1 // pred_region
      %893 = vsyncadd [#allocation17], 0
      %s894 = sshll.u32 [#allocation16], 4
      %s895 = int_to_ptr.vmem [resolvable:$true] %s894
      %s896 = sshll.u32 %s10, 4
      %s897 = int_to_ptr.hbm [resolvable:$true] %s896
      %902 = dma.vmem_to_hbm [thread:$0]  %s895, 1024, %s897, [#allocation17], 128, 128, 8
    $region73: #{tpu_custom_call.1} parent=1 // pred_fallthru
      _
    // Predicated region
    $region74: #{tpu_custom_call.1} parent=1 // pred_check
      _
    $region75: #{tpu_custom_call.1} parent=1 // pred_check_branch
      %904 = sbr.rel (0) target = $region77
    $region76: #{tpu_custom_call.1} parent=1 // pred_region
      %906 = dma.done [#allocation5], 256
    $region77: #{tpu_custom_call.1} parent=1 // pred_fallthru
      _
    // Predicated region
    $region78: #{tpu_custom_call.1} parent=1 // pred_check
      _
    $region79: #{tpu_custom_call.1} parent=1 // pred_check_branch
      %908 = sbr.rel (0) target = $region81
    $region80: #{tpu_custom_call.1} parent=1 // pred_region
      %910 = dma.done [#allocation17], 1024
    $region81: #{tpu_custom_call.1} parent=1 // pred_fallthru
      _
    %911 = vsyncpa [#allocation4], 1
    %912 = vsyncpa [#allocation7], 1
    %913 = vsyncpa [#allocation10], 1
    %914 = vsyncpa [#allocation13], 1
    %915 = vsyncpa [#allocation5], 1
    %916 = vsyncpa [#allocation17], 1

</llo_original>
